<compile_context>
chip_gen: v5e
topology: v5e:2x2
jax: 0.10.0
libtpu: 0.0.40
codegen_flags: <defaults>
</compile_context>

<pallas_src>
import functools

import jax
import jax.numpy as jnp
from jax import lax
from jax.experimental import pallas as pl
from jax.experimental.pallas import tpu as pltpu


def _round_up(a: int, b: int) -> int:
    return ((a + b - 1) // b) * b


def _monotonic_kernel(x_ref, w_ref, t_ref, y_ref, *, K: int, h_Kp: int):
    # x_ref: (TILE_B, n)        batch tile of x in its natural HBM layout
    # w_ref: (K*h_Kp, n)        fused, pre-exponentiated weights (grid-resident)
    # t_ref: (K*h_Kp, 1)  f32   fused biases; group-pad rows hold float32.min
    # y_ref: (1, TILE_B)  f32   lane-dense output tile
    #
    # g^T = W_all @ x^T via a transposed contraction over the shared feature
    # axis (same NT pattern as flash-attention's q.k^T) -- batch lands on the
    # lane (minor) axis without any wrapper-side transpose of x.
    g = lax.dot_general(
        w_ref[...], x_ref[...],
        dimension_numbers=(((1,), (1,)), ((), ())),
        preferred_element_type=jnp.float32,
    )                                                   # (K*h_Kp, TILE_B)
    g = g + t_ref[...]                                  # lane-broadcast bias add

    # Per-group max over h_Kp sublane rows (8-aligned -> free slices), then a
    # running min over the K groups.  K is small and static.
    y = jnp.max(g[0:h_Kp, :], axis=0, keepdims=True)    # (1, TILE_B)
    for i in range(1, K):
        gi = jnp.max(g[i * h_Kp:(i + 1) * h_Kp, :], axis=0, keepdims=True)
        y = jnp.minimum(y, gi)
    y_ref[...] = y


def monotonic_nn_multiv(x, z, t, mask_bool, *, tile_b: int = 8192,
                        bf16_inputs: bool = False):
    """x: (B, n) f32, z: (K, h_K, n) f32, t: (K, h_K) f32, mask_bool: (n,) bool."""
    B, n = x.shape
    K, h_K, n_w = z.shape
    assert n_w == n and t.shape == (K, h_K)
    assert tile_b % 128 == 0

    # ---- Param-only preprocessing (hoisted out of the batch hot path). ------
    # jnp.where avoids the 0*inf NaN of mask*exp(z) + (1-mask)*z on overflow.
    w = jnp.where(mask_bool, jnp.exp(z), z).astype(jnp.float32)        # (K, h_K, n)
    # Pad each group to a multiple of 8 rows: zero weights + huge negative bias
    # so padded rows can never win the per-group max.
    h_Kp = _round_up(h_K, 8)
    R = K * h_Kp
    neg = float(jnp.finfo(jnp.float32).min)
    w_all = jnp.zeros((K, h_Kp, n), jnp.float32).at[:, :h_K, :].set(w).reshape(R, n)
    t_all = jnp.full((K, h_Kp, 1), neg, jnp.float32).at[:, :h_K, 0].set(
        t.astype(jnp.float32)).reshape(R, 1)

    in_dtype = jnp.bfloat16 if bf16_inputs else jnp.float32
    x_in = x.astype(in_dtype)          # natural (B, n) layout: no HBM transpose pass
    w_in = w_all.astype(in_dtype)

    # ---- Batch tiling. ------------------------------------------------------
    # Big tiles amortize per-step overhead (64-256 KiB DMAs), but keep >= 4
    # grid steps (>= 2 per TensorCore on v7x megacore).  Lane-aligned to 128.
    tb = max(128, min(tile_b, _round_up(pl.cdiv(B, 4), 128)))
    grid_b = pl.cdiv(B, tb)            # ragged final tile handled by Pallas masking

    grid_spec = pltpu.PrefetchScalarGridSpec(
        num_scalar_prefetch=0,
        grid=(grid_b,),
        in_specs=[
            # Batch tile of x (contiguous HBM reads; last dim == full n).
            pl.BlockSpec((tb, n), lambda i: (i, 0)),
            # Fused weights / biases: constant index_map -> VMEM-resident.
            pl.BlockSpec((R, n), lambda i: (0, 0)),
            pl.BlockSpec((R, 1), lambda i: (0, 0)),
        ],
        out_specs=pl.BlockSpec((1, tb), lambda i: (0, i)),   # lane-dense output
    )

    out = pl.pallas_call(
        functools.partial(_monotonic_kernel, K=K, h_Kp=h_Kp),
        out_shape=jax.ShapeDtypeStruct((1, B), jnp.float32),
        grid_spec=grid_spec,
        compiler_params=pltpu.CompilerParams(
            dimension_semantics=("parallel",),      # megacore-shardable batch axis
            vmem_limit_bytes=32 * 1024 * 1024,      # headroom above v5e 16 MiB default
        ),
    )(x_in, w_in, t_all)

    return out[0]                                   # (B,)


def _reference(x, z, t, mask_bool, *, cast=None):
    # Pure-JAX mirror of the PyTorch forward (original masked-sum formulation).
    m = mask_bool.astype(jnp.float32)
    y = None
    for i in range(z.shape[0]):
        w = m * jnp.exp(z[i]) + (1.0 - m) * z[i]
        xi = x
        if cast is not None:                         # mirror the bf16 input path
            w = w.astype(cast).astype(jnp.float32)
            xi = x.astype(cast).astype(jnp.float32)
        g = xi @ w.T + t[i]
        gm = jnp.max(g, axis=1)
        y = gm if y is None else jnp.minimum(y, gm)
    return y


if __name__ == "__main__":
    # Small shapes consistent with the module's signature.
    n, K, h_K = 4, 3, 12     # h_K not a multiple of 8 -> exercises group padding
    b_z, b_t = 1.0, 1.0
    B = 1000                 # not a multiple of the tile -> ragged last grid step

    key = jax.random.PRNGKey(0)
    kx, kz, kt = jax.random.split(key, 3)

    x = jax.random.normal(kx, (B, n), dtype=jnp.float32)
    # Truncated-normal init in the spirit of torch.nn.init.trunc_normal_ (a=-2, b=2).
    z = jax.random.truncated_normal(kz, -2.0, 2.0, (K, h_K, n), dtype=jnp.float32) * b_z
    t = jax.random.truncated_normal(kt, -2.0, 2.0, (K, h_K), dtype=jnp.float32) * b_t

    # Monotonicity mask over input features (True -> positive weight via exp).
    mask_bool = jnp.array([True, False, True, False])

    # TODO(synk): `beta` and `softmax` from __init__ are unused in forward; omitted.

    fwd = jax.jit(monotonic_nn_multiv, static_argnames=("tile_b", "bf16_inputs"))

    # Full-precision path.
    y = fwd(x, z, t, mask_bool)
    jax.block_until_ready(y)
    y_ref = _reference(x, z, t, mask_bool)
    assert y.shape == (B,)
    assert jnp.allclose(y, y_ref, rtol=1e-4, atol=1e-4)

    # Optional bf16-input path (halves dominant HBM traffic); f32 accumulation.
    y16 = fwd(x, z, t, mask_bool, bf16_inputs=True)
    jax.block_until_ready(y16)
    y16_ref = _reference(x, z, t, mask_bool, cast=jnp.bfloat16)
    assert jnp.allclose(y16, y16_ref, rtol=1e-3, atol=1e-3)

    print("KERNEL_OK")
</pallas_src>

<mosaic_0001>
module attributes {stable_mosaic.version = 11 : i64} {
  func.func @_monotonic_kernel(%arg0: i32, %arg1: memref<256x4xf32, #tpu.memory_space<vmem>>, %arg2: memref<48x4xf32, #tpu.memory_space<vmem>>, %arg3: memref<48x1xf32, #tpu.memory_space<vmem>>, %arg4: memref<1x256xf32, #tpu.memory_space<vmem>>) attributes {dimension_semantics = [#tpu.dimension_semantics<parallel>], iteration_bounds = array<i64: 4>, scalar_prefetch = 0 : i64, scratch_operands = 0 : i64, tpu.core_type = #tpu.core_type<tc>, window_params = [{transform_indices = @transform_0, window_bounds = array<i64: 256, 4>}, {pipeline_mode = #tpu.pipeline_mode<synchronous>, transform_indices = @transform_1, window_bounds = array<i64: 48, 4>}, {pipeline_mode = #tpu.pipeline_mode<synchronous>, transform_indices = @transform_2, window_bounds = array<i64: 48, 1>}, {transform_indices = @transform_3, window_bounds = array<i64: 1, 256>}]} {
    %c0 = arith.constant 0 : index
    %c0_0 = arith.constant 0 : index
    %0 = vector.load %arg2[%c0, %c0_0] : memref<48x4xf32, #tpu.memory_space<vmem>>, vector<48x4xf32>
    %c0_1 = arith.constant 0 : index
    %c0_2 = arith.constant 0 : index
    %1 = vector.load %arg1[%c0_1, %c0_2] : memref<256x4xf32, #tpu.memory_space<vmem>>, vector<256x4xf32>
    %cst = arith.constant dense<0.000000e+00> : vector<48x256xf32>
    %2 = tpu.matmul %0, %1, %cst {dimension_numbers = #tpu.dot_dimension_numbers<[1], [1], [0], [0], [0, 0, 1, 0], [], []>} : vector<48x4xf32>, vector<256x4xf32>, vector<48x256xf32> -> vector<48x256xf32>
    %c0_3 = arith.constant 0 : index
    %c0_4 = arith.constant 0 : index
    %3 = vector.load %arg3[%c0_3, %c0_4] : memref<48x1xf32, #tpu.memory_space<vmem>>, vector<48x1xf32>
    %4 = vector.broadcast %3 : vector<48x1xf32> to vector<48x256xf32>
    %5 = arith.addf %2, %4 : vector<48x256xf32>
    %6 = vector.extract_strided_slice %5 {offsets = [0, 0], sizes = [16, 256], strides = [1, 1]} : vector<48x256xf32> to vector<16x256xf32>
    %cst_5 = arith.constant dense<0xFF800000> : vector<256xf32>
    %7 = vector.multi_reduction <maximumf>, %6, %cst_5 [0] : vector<16x256xf32> to vector<256xf32>
    %8 = vector.shape_cast %7 : vector<256xf32> to vector<1x256xf32>
    %9 = vector.extract_strided_slice %5 {offsets = [16, 0], sizes = [16, 256], strides = [1, 1]} : vector<48x256xf32> to vector<16x256xf32>
    %cst_6 = arith.constant dense<0xFF800000> : vector<256xf32>
    %10 = vector.multi_reduction <maximumf>, %9, %cst_6 [0] : vector<16x256xf32> to vector<256xf32>
    %11 = vector.shape_cast %10 : vector<256xf32> to vector<1x256xf32>
    %12 = arith.minimumf %8, %11 : vector<1x256xf32>
    %13 = vector.extract_strided_slice %5 {offsets = [32, 0], sizes = [16, 256], strides = [1, 1]} : vector<48x256xf32> to vector<16x256xf32>
    %cst_7 = arith.constant dense<0xFF800000> : vector<256xf32>
    %14 = vector.multi_reduction <maximumf>, %13, %cst_7 [0] : vector<16x256xf32> to vector<256xf32>
    %15 = vector.shape_cast %14 : vector<256xf32> to vector<1x256xf32>
    %16 = arith.minimumf %12, %15 : vector<1x256xf32>
    %c0_8 = arith.constant 0 : index
    %c0_9 = arith.constant 0 : index
    %17 = vector.load %arg4[%c0_8, %c0_9] : memref<1x256xf32, #tpu.memory_space<vmem>>, vector<1x256xf32>
    tpu.vector_store %arg4[%c0_8, %c0_9], %16 {strides = array<i32>} : memref<1x256xf32, #tpu.memory_space<vmem>>, vector<1x256xf32>,
    return
  }
  func.func @transform_0(%arg0: i32) -> (i32, i32) {
    %c0_i32 = arith.constant 0 : i32
    %c0_i32_0 = arith.constant 0 : i32
    return %arg0, %c0_i32 : i32, i32
  }
  func.func @transform_1(%arg0: i32) -> (i32, i32) {
    %c0_i32 = arith.constant 0 : i32
    %c0_i32_0 = arith.constant 0 : i32
    %c0_i32_1 = arith.constant 0 : i32
    return %c0_i32, %c0_i32_0 : i32, i32
  }
  func.func @transform_2(%arg0: i32) -> (i32, i32) {
    %c0_i32 = arith.constant 0 : i32
    %c0_i32_0 = arith.constant 0 : i32
    %c0_i32_1 = arith.constant 0 : i32
    return %c0_i32, %c0_i32_0 : i32, i32
  }
  func.func @transform_3(%arg0: i32) -> (i32, i32) {
    %c0_i32 = arith.constant 0 : i32
    %c0_i32_0 = arith.constant 0 : i32
    return %c0_i32, %arg0 : i32, i32
  }
}

</mosaic_0001>

<llo_original>
// kernel: monotonic_nn_multiv.1
$region0: #{monotonic_nn_multiv.1}
  #allocation0 [shape = 'u32[]', space=smem, size = 0x4, offset = 0x4, fixed_abs, tag = 'smem constant byte address 0x4 - core index']
  #allocation1 [shape = 'u32[72,128]{1,0:T(1,128)}', space=vmem, size = 0x9000, scoped, tag = 'internal scratch']
  %s0 = inlined_call_operand.vmem [shape: f32[1000,4], index: 0, kind: input, shape index: {}]
  %s1 = inlined_call_operand.vmem [shape: f32[48,4], index: 1, kind: input, shape index: {}]
  %s2 = inlined_call_operand.vmem [shape: f32[48,1], index: 2, kind: input, shape index: {}]
  %s3 = inlined_call_operand.hbm [shape: f32[1,1000], index: 3, kind: output, shape index: {}]
  %s4 = sld [smem:[#allocation0]]
  $region45: #{monotonic_nn_multiv.1} parent=0
    _
  %s6 = ssub.s32 1, %s4
  %s7 = scalar_select 0, %s6, %s4
  $region1: #{monotonic_nn_multiv.1} parent=0
    #allocation2 [shape = 'u8[2048]{0}', space=vmem, size = 0x800, scoped, tag = 'output window, operand 0']
    #allocation3 [shape = 's32[2]{0}', space=sflag, size = 0x8, scoped, tag = 'scoped memory for monotonic_nn_multiv.1']
    %8 = vsyncpa [#allocation3], 0
    %s9 = scalar_lea.sflag [#allocation3], 1
    %10 = vsyncpa %s9, 0
    loop: start=0, step=1, limit=6
    $region2: #{monotonic_nn_multiv.1} parent=1 // loop_pre_header
      _
    $region3: #{monotonic_nn_multiv.1} parent=1 // loop_header
      %s12 = sphi 0, %s16
      %p13 = scmp.ge.s32.totalorder %s12, 6
      %s22 = sphi 0, %s24
      %s25 = sphi 0, %s22
      %s26 = sphi 0, %s25
      %s42 = sphi 0, %s26
      %s46 = sphi 0, %s46
      %s48 = sphi 0, %s46
      %s49 = sphi 0, %s48
      %s63 = sphi 0, %s49
      %s67 = sphi 0, %s67
      %s69 = sphi 0, %s67
      %s70 = sphi 0, %s69
      %s84 = sphi 0, %s70
      %s90 = sphi 0, %s92
      %s93 = sphi 0, %s90
      %s94 = sphi 0, %s93
      %s110 = sphi 0, %s94
    $region4: #{monotonic_nn_multiv.1} parent=1 // loop_header_branch
      %15 = sbr.rel (%p13) target = $region8
    $region5: #{monotonic_nn_multiv.1} parent=1 // loop_body
      %s17 = ssub.s32 %s12, 1
      %s18 = ssub.s32 %s12, 2
      %s19 = sadd.s32 %s12, 1
      %s20 = ssub.s32 %s12, %s19
      %p21 = scmp.eq.s32.totalorder %s20, 0
      %s23 = sadd.s32 %s22, 1
      %s24 = scalar_select %p21, %s22, %s23
      %p27 = pneg %p21
      %p28 = scmp.eq.s32.totalorder %s12, 3
      %p29 = por %p27, %p28
      %p30 = scmp.ne.s32.totalorder %s22, %s25
      %p31 = scmp.eq.s32.totalorder %s12, 0
      %p32 = por %p30, %p31
      %p33 = scmp.ne.s32.totalorder %s22, %s25
      %p34 = scmp.eq.s32.totalorder %s17, 3
      %p35 = por %p33, %p34
      %p36 = scmp.ne.s32.totalorder %s25, %s26
      %p37 = scmp.eq.s32.totalorder %s17, 0
      %p38 = por %p36, %p37
      %p39 = scmp.ne.s32.totalorder %s25, %s26
      %p40 = scmp.eq.s32.totalorder %s18, 3
      %p41 = por %p39, %p40
      %p43 = scmp.ne.s32.totalorder %s26, %s42
      %p44 = scmp.eq.s32.totalorder %s18, 0
      %p45 = por %p43, %p44
      %s47 = sadd.s32 %s46, 1
      %p50 = scmp.eq.s32.totalorder %s12, 3
      %p51 = scmp.ne.s32.totalorder %s46, %s48
      %p52 = scmp.eq.s32.totalorder %s12, 0
      %p53 = por %p51, %p52
      %p54 = scmp.ne.s32.totalorder %s46, %s48
      %p55 = scmp.eq.s32.totalorder %s17, 3
      %p56 = por %p54, %p55
      %p57 = scmp.ne.s32.totalorder %s48, %s49
      %p58 = scmp.eq.s32.totalorder %s17, 0
      %p59 = por %p57, %p58
      %p60 = scmp.ne.s32.totalorder %s48, %s49
      %p61 = scmp.eq.s32.totalorder %s18, 3
      %p62 = por %p60, %p61
      %p64 = scmp.ne.s32.totalorder %s49, %s63
      %p65 = scmp.eq.s32.totalorder %s18, 0
      %p66 = por %p64, %p65
      %s68 = sadd.s32 %s67, 1
      %p71 = scmp.eq.s32.totalorder %s12, 3
      %p72 = scmp.ne.s32.totalorder %s67, %s69
      %p73 = scmp.eq.s32.totalorder %s12, 0
      %p74 = por %p72, %p73
      %p75 = scmp.ne.s32.totalorder %s67, %s69
      %p76 = scmp.eq.s32.totalorder %s17, 3
      %p77 = por %p75, %p76
      %p78 = scmp.ne.s32.totalorder %s69, %s70
      %p79 = scmp.eq.s32.totalorder %s17, 0
      %p80 = por %p78, %p79
      %p81 = scmp.ne.s32.totalorder %s69, %s70
      %p82 = scmp.eq.s32.totalorder %s18, 3
      %p83 = por %p81, %p82
      %p85 = scmp.ne.s32.totalorder %s70, %s84
      %p86 = scmp.eq.s32.totalorder %s18, 0
      %p87 = por %p85, %p86
      %s88 = ssub.s32 %s12, %s19
      %p89 = scmp.eq.s32.totalorder %s88, 0
      %s91 = sadd.s32 %s90, 1
      %s92 = scalar_select %p89, %s90, %s91
      %p95 = pneg %p89
      %p96 = scmp.eq.s32.totalorder %s12, 3
      %p97 = por %p95, %p96
      %p98 = scmp.ne.s32.totalorder %s90, %s93
      %p99 = scmp.eq.s32.totalorder %s12, 0
      %p100 = por %p98, %p99
      %p101 = scmp.ne.s32.totalorder %s90, %s93
      %p102 = scmp.eq.s32.totalorder %s17, 3
      %p103 = por %p101, %p102
      %p104 = scmp.ne.s32.totalorder %s93, %s94
      %p105 = scmp.eq.s32.totalorder %s17, 0
      %p106 = por %p104, %p105
      %p107 = scmp.ne.s32.totalorder %s93, %s94
      %p108 = scmp.eq.s32.totalorder %s18, 3
      %p109 = por %p107, %p108
      %p111 = scmp.ne.s32.totalorder %s94, %s110
      %p112 = scmp.eq.s32.totalorder %s18, 0
      %p113 = por %p111, %p112
      %p114 = scmp.le.s32.totalorder 1, %s12
      %p115 = scmp.lt.s32.totalorder %s12, 5
      %p116 = pnand %p114, %p115
      %p117 = pneg %p116
      // Predicated region
      $region9: #{monotonic_nn_multiv.1} parent=5 // pred_check
        _
      $region10: #{monotonic_nn_multiv.1} parent=5 // pred_check_branch
        %119 = sbr.rel (%p116) target = $region12
      $region11: #{monotonic_nn_multiv.1} parent=5 // pred_region
        %s120 = ssub.s32 %s12, 1
        // Predicated region
        $region13: #{monotonic_nn_multiv.1} parent=11 // pred_check
          %p121 = pneg %p59
        $region14: #{monotonic_nn_multiv.1} parent=11 // pred_check_branch
          %123 = sbr.rel (%p121) target = $region16
        $region15: #{monotonic_nn_multiv.1} parent=11 // pred_region
          _
        $region16: #{monotonic_nn_multiv.1} parent=11 // pred_fallthru
          _
        // Predicated region
        $region17: #{monotonic_nn_multiv.1} parent=11 // pred_check
          %p124 = pneg %p80
        $region18: #{monotonic_nn_multiv.1} parent=11 // pred_check_branch
          %126 = sbr.rel (%p124) target = $region20
        $region19: #{monotonic_nn_multiv.1} parent=11 // pred_region
          _
        $region20: #{monotonic_nn_multiv.1} parent=11 // pred_fallthru
          _
      $region12: #{monotonic_nn_multiv.1} parent=5 // pred_fallthru
        _
      %p127 = scmp.lt.s32.totalorder %s12, 4
      // Predicated region
      $region21: #{monotonic_nn_multiv.1} parent=5 // pred_check
        %p128 = pneg %p127
      $region22: #{monotonic_nn_multiv.1} parent=5 // pred_check_branch
        %130 = sbr.rel (%p128) target = $region24
      $region23: #{monotonic_nn_multiv.1} parent=5 // pred_region
        // Predicated region
        $region25: #{monotonic_nn_multiv.1} parent=23 // pred_check
          %p131 = pneg %p32
        $region26: #{monotonic_nn_multiv.1} parent=23 // pred_check_branch
          %133 = sbr.rel (%p131) target = $region28
        $region27: #{monotonic_nn_multiv.1} parent=23 // pred_region
          %s134 = smul.u32 32, %s12
          %s135 = ssub.s32 125, %s134
          %p136 = scmp.lt.s32.totalorder %s135, 32
          %s137 = scalar_select %p136, %s135, 32
          %s138 = smul.u32 8, %s137
          %p139 = scmp.lt.s32.totalorder %s134, 124
          %s140 = scalar_select %p139, %s134, 124
          %s141 = smul.addr %s140, 8
          %s142 = scalar_lea.vmem %s0, %s141
          %s143 = smul.u32 32, %s12
          %s144 = ssub.s32 125, %s143
          %p145 = scmp.lt.s32.totalorder %s144, 32
          %s146 = scalar_select %p145, %s144, 32
          %s147 = smul.u32 8, %s146
        $region28: #{monotonic_nn_multiv.1} parent=23 // pred_fallthru
          _
      $region24: #{monotonic_nn_multiv.1} parent=5 // pred_fallthru
        _
      %p148 = scmp.le.s32.totalorder 1, %s12
      %p149 = scmp.lt.s32.totalorder %s12, 5
      %p150 = pnand %p148, %p149
      %p151 = pneg %p150
      // Predicated region
      $region29: #{monotonic_nn_multiv.1} parent=5 // pred_check
        _
      $region30: #{monotonic_nn_multiv.1} parent=5 // pred_check_branch
        %153 = sbr.rel (%p150) target = $region32
      $region31: #{monotonic_nn_multiv.1} parent=5 // pred_region
        %s154 = ssub.s32 %s12, 1
        %s155 = smul.u32 32, %s17
        %s156 = ssub.s32 125, %s155
        %p157 = scmp.lt.s32.totalorder %s156, 32
        %s158 = scalar_select %p157, %s156, 32
        %s159 = smul.u32 8, %s158
        %p160 = scmp.lt.s32.totalorder %s155, 124
        %s161 = scalar_select %p160, %s155, 124
        %s162 = smul.addr %s161, 8
        %s163 = scalar_lea.vmem %s0, %s162
        %p164 = pneg %p38
        %p165 = pneg %p35
        %p166 = pneg %p59
        %p167 = pneg %p56
        %p168 = pneg %p80
        %p169 = pneg %p77
        %p170 = pneg %p106
        %p171 = pneg %p103
        %s172 = sand.u32 %s93, 1
        %s173 = scalar_lea.sflag [#allocation3], %s172
        %s174 = sand.u32 %s93, 1
        %s175 = smul.addr %s174, 2
        %s176 = scalar_lea.vmem [#allocation2], %s175
        %s177 = smul.u32 32, %s17
        %s178 = ssub.s32 125, %s177
        %p179 = scmp.lt.s32.totalorder %s178, 32
        %s180 = scalar_select %p179, %s178, 32
        %s181 = smul.u32 8, %s180
        %p182 = scmp.lt.s32.totalorder %s177, 124
        %s183 = scalar_select %p182, %s177, 124
        %s184 = smul.addr %s183, 8
        %s185 = scalar_lea.vmem %s0, %s184
        %s186 = smul.u32 32, %s17
        %s187 = ssub.s32 125, %s186
        %p188 = scmp.lt.s32.totalorder %s187, 32
        %s189 = scalar_select %p188, %s187, 32
        %s190 = smul.u32 8, %s189
        %s191 = smul.u32 2, %s17
        %v192 = vld [vmem:[%s1] sm:$0xff]
        %v193 = vld [vmem:[%s1 + $0x8] sm:$0xff]
        %v194 = vld [vmem:[%s1 + $0x10] sm:$0xff]
        %v195 = vld [vmem:[%s1 + $0x18] sm:$0xff]
        %v196 = vld [vmem:[%s1 + $0x20] sm:$0xff]
        %v197 = vld [vmem:[%s1 + $0x28] sm:$0xff]
        %v198 = vld [vmem:[%s185] sm:$0xff]
        %v199 = vld [vmem:[%s185 + $0x8] sm:$0xff]
        %v200 = vld [vmem:[%s185 + $0x10] sm:$0xff]
        %v201 = vld [vmem:[%s185 + $0x18] sm:$0xff]
        %v202 = vld [vmem:[%s185 + $0x20] sm:$0xff]
        %v203 = vld [vmem:[%s185 + $0x28] sm:$0xff]
        %v204 = vld [vmem:[%s185 + $0x30] sm:$0xff]
        %v205 = vld [vmem:[%s185 + $0x38] sm:$0xff]
        %v206 = vld [vmem:[%s185 + $0x40] sm:$0xff]
        %v207 = vld [vmem:[%s185 + $0x48] sm:$0xff]
        %v208 = vld [vmem:[%s185 + $0x50] sm:$0xff]
        %v209 = vld [vmem:[%s185 + $0x58] sm:$0xff]
        %v210 = vld [vmem:[%s185 + $0x60] sm:$0xff]
        %v211 = vld [vmem:[%s185 + $0x68] sm:$0xff]
        %v212 = vld [vmem:[%s185 + $0x70] sm:$0xff]
        %v213 = vld [vmem:[%s185 + $0x78] sm:$0xff]
        %v214 = vld [vmem:[%s185 + $0x80] sm:$0xff]
        %v215 = vld [vmem:[%s185 + $0x88] sm:$0xff]
        %v216 = vld [vmem:[%s185 + $0x90] sm:$0xff]
        %v217 = vld [vmem:[%s185 + $0x98] sm:$0xff]
        %v218 = vld [vmem:[%s185 + $0xa0] sm:$0xff]
        %v219 = vld [vmem:[%s185 + $0xa8] sm:$0xff]
        %v220 = vld [vmem:[%s185 + $0xb0] sm:$0xff]
        %v221 = vld [vmem:[%s185 + $0xb8] sm:$0xff]
        %v222 = vld [vmem:[%s185 + $0xc0] sm:$0xff]
        %v223 = vld [vmem:[%s185 + $0xc8] sm:$0xff]
        %v224 = vld [vmem:[%s185 + $0xd0] sm:$0xff]
        %v225 = vld [vmem:[%s185 + $0xd8] sm:$0xff]
        %v226 = vld [vmem:[%s185 + $0xe0] sm:$0xff]
        %v227 = vld [vmem:[%s185 + $0xe8] sm:$0xff]
        %v228 = vld [vmem:[%s185 + $0xf0] sm:$0xff]
        %v229 = vld [vmem:[%s185 + $0xf8] sm:$0xff]
        %v230 = vld [vmem:[%s2] sm:$0xff]
        %v231 = vld [vmem:[%s2 + $0x8] sm:$0xff]
        %v232 = vld [vmem:[%s2 + $0x10] sm:$0xff]
        %v233 = vld [vmem:[%s2 + $0x18] sm:$0xff]
        %v234 = vld [vmem:[%s2 + $0x20] sm:$0xff]
        %v235 = vld [vmem:[%s2 + $0x28] sm:$0xff]
        %237 = vset.pattern.permute.xlu0 0
        %238 = vperm.xlu0 %237, %v230
        %v239 = vpop.permute.xlu0 %238
        %242 = vset.pattern.permute.xlu0 0
        %243 = vperm.xlu0 %242, %v231
        %v244 = vpop.permute.xlu0 %243
        %247 = vset.pattern.permute.xlu0 0
        %248 = vperm.xlu0 %247, %v232
        %v249 = vpop.permute.xlu0 %248
        %252 = vset.pattern.permute.xlu0 0
        %253 = vperm.xlu0 %252, %v233
        %v254 = vpop.permute.xlu0 %253
        %257 = vset.pattern.permute.xlu0 0
        %258 = vperm.xlu0 %257, %v234
        %v259 = vpop.permute.xlu0 %258
        %262 = vset.pattern.permute.xlu0 0
        %263 = vperm.xlu0 %262, %v235
        %v264 = vpop.permute.xlu0 %263
        %vm266 = vcmask 31744
        %v268 = vsel %vm266, %v192, 0
        %v271 = vsel %vm266, %v193, 0
        %v274 = vsel %vm266, %v194, 0
        %v277 = vsel %vm266, %v195, 0
        %v280 = vsel %vm266, %v196, 0
        %v283 = vsel %vm266, %v197, 0
        %v286 = vsel %vm266, %v198, 0
        %v289 = vsel %vm266, %v199, 0
        %v292 = vsel %vm266, %v200, 0
        %v295 = vsel %vm266, %v201, 0
        %v298 = vsel %vm266, %v202, 0
        %v301 = vsel %vm266, %v203, 0
        %v304 = vsel %vm266, %v204, 0
        %v307 = vsel %vm266, %v205, 0
        %v310 = vsel %vm266, %v206, 0
        %v313 = vsel %vm266, %v207, 0
        %v316 = vsel %vm266, %v208, 0
        %v319 = vsel %vm266, %v209, 0
        %v322 = vsel %vm266, %v210, 0
        %v325 = vsel %vm266, %v211, 0
        %v328 = vsel %vm266, %v212, 0
        %v331 = vsel %vm266, %v213, 0
        %v334 = vsel %vm266, %v214, 0
        %v337 = vsel %vm266, %v215, 0
        %v340 = vsel %vm266, %v216, 0
        %v343 = vsel %vm266, %v217, 0
        %v346 = vsel %vm266, %v218, 0
        %v349 = vsel %vm266, %v219, 0
        %v352 = vsel %vm266, %v220, 0
        %v355 = vsel %vm266, %v221, 0
        %v358 = vsel %vm266, %v222, 0
        %v361 = vsel %vm266, %v223, 0
        %v364 = vsel %vm266, %v224, 0
        %v367 = vsel %vm266, %v225, 0
        %v370 = vsel %vm266, %v226, 0
        %v373 = vsel %vm266, %v227, 0
        %v376 = vsel %vm266, %v228, 0
        %v379 = vsel %vm266, %v229, 0
        %381 = vmatpush.xpose.msra.mxu0 %v331
        %382 = vmatpush.xpose.msra.mxu0 %v328
        %383 = vmatpush.xpose.msra.mxu0 %v325
        %384 = vmatpush.xpose.msra.mxu0 %v322
        %385 = vmatpush.xpose.msra.mxu0 %v319
        %386 = vmatpush.xpose.msra.mxu0 %v316
        %387 = vmatpush.xpose.msra.mxu0 %v313
        %388 = vmatpush.xpose.msra.mxu0 %v310
        %389 = vmatpush.xpose.msra.mxu0 %v307
        %390 = vmatpush.xpose.msra.mxu0 %v304
        %391 = vmatpush.xpose.msra.mxu0 %v301
        %392 = vmatpush.xpose.msra.mxu0 %v298
        %393 = vmatpush.xpose.msra.mxu0 %v295
        %394 = vmatpush.xpose.msra.mxu0 %v292
        %395 = vmatpush.xpose.msra.mxu0 %v289
        %396 = vmatpush.xpose.msra.mxu0 %v286
        %397 = vmatmul.f32.gmra.mxu0 %v268
        %v398 = vpop.f32.mrf.mxu0
        %v399 = vadd.f32 %v239, %v398
        %400 = vmatmul.f32.gmra.mxu0 %v271
        %v401 = vpop.f32.mrf.mxu0
        %v402 = vadd.f32 %v244, %v401
        %403 = vmatmul.f32.gmra.mxu0 %v274
        %v404 = vpop.f32.mrf.mxu0
        %v405 = vadd.f32 %v249, %v404
        %406 = vmatmul.f32.gmra.mxu0 %v277
        %v407 = vpop.f32.mrf.mxu0
        %v408 = vadd.f32 %v254, %v407
        %409 = vmatmul.f32.gmra.mxu0 %v280
        %v410 = vpop.f32.mrf.mxu0
        %v411 = vadd.f32 %v259, %v410
        %412 = vmatmul.f32.gmra.mxu0 %v283
        %v413 = vpop.f32.mrf.mxu0
        %v414 = vadd.f32 %v264, %v413
        %415 = vdwg.mxu0
        %416 = vmatpush.xpose.msra.mxu0 %v379
        %417 = vmatpush.xpose.msra.mxu0 %v376
        %418 = vmatpush.xpose.msra.mxu0 %v373
        %419 = vmatpush.xpose.msra.mxu0 %v370
        %420 = vmatpush.xpose.msra.mxu0 %v367
        %421 = vmatpush.xpose.msra.mxu0 %v364
        %422 = vmatpush.xpose.msra.mxu0 %v361
        %423 = vmatpush.xpose.msra.mxu0 %v358
        %424 = vmatpush.xpose.msra.mxu0 %v355
        %425 = vmatpush.xpose.msra.mxu0 %v352
        %426 = vmatpush.xpose.msra.mxu0 %v349
        %427 = vmatpush.xpose.msra.mxu0 %v346
        %428 = vmatpush.xpose.msra.mxu0 %v343
        %429 = vmatpush.xpose.msra.mxu0 %v340
        %430 = vmatpush.xpose.msra.mxu0 %v337
        %431 = vmatpush.xpose.msra.mxu0 %v334
        %432 = vmatmul.f32.gmra.mxu0 %v268
        %v433 = vpop.f32.mrf.mxu0
        %v434 = vadd.f32 %v239, %v433
        %435 = vmatmul.f32.gmra.mxu0 %v271
        %v436 = vpop.f32.mrf.mxu0
        %v437 = vadd.f32 %v244, %v436
        %438 = vmatmul.f32.gmra.mxu0 %v274
        %v439 = vpop.f32.mrf.mxu0
        %v440 = vadd.f32 %v249, %v439
        %441 = vmatmul.f32.gmra.mxu0 %v277
        %v442 = vpop.f32.mrf.mxu0
        %v443 = vadd.f32 %v254, %v442
        %444 = vmatmul.f32.gmra.mxu0 %v280
        %v445 = vpop.f32.mrf.mxu0
        %v446 = vadd.f32 %v259, %v445
        %447 = vmatmul.f32.gmra.mxu0 %v283
        %v448 = vpop.f32.mrf.mxu0
        %v449 = vadd.f32 %v264, %v448
        %450 = vdwg.mxu0
        %v451 = vmax.f32 %v399, %v402
        %v452 = vrot.slane %v451, 4
        %v453 = vmax.f32 %v451, %v452
        %v454 = vrot.slane %v453, 2
        %v455 = vmax.f32 %v453, %v454
        %v456 = vrot.slane %v455, 1
        %v457 = vmax.f32 %v455, %v456
        %v458 = vmax.f32 %v434, %v437
        %v459 = vrot.slane %v458, 4
        %v460 = vmax.f32 %v458, %v459
        %v461 = vrot.slane %v460, 2
        %v462 = vmax.f32 %v460, %v461
        %v463 = vrot.slane %v462, 1
        %v464 = vmax.f32 %v462, %v463
        %v465 = vmax.f32 %v405, %v408
        %v466 = vrot.slane %v465, 4
        %v467 = vmax.f32 %v465, %v466
        %v468 = vrot.slane %v467, 2
        %v469 = vmax.f32 %v467, %v468
        %v470 = vrot.slane %v469, 1
        %v471 = vmax.f32 %v469, %v470
        %v472 = vmax.f32 %v440, %v443
        %v473 = vrot.slane %v472, 4
        %v474 = vmax.f32 %v472, %v473
        %v475 = vrot.slane %v474, 2
        %v476 = vmax.f32 %v474, %v475
        %v477 = vrot.slane %v476, 1
        %v478 = vmax.f32 %v476, %v477
        %v479 = vmin.f32 %v457, %v471
        %v480 = vmin.f32 %v464, %v478
        %v481 = vmax.f32 %v411, %v414
        %v482 = vrot.slane %v481, 4
        %v483 = vmax.f32 %v481, %v482
        %v484 = vrot.slane %v483, 2
        %v485 = vmax.f32 %v483, %v484
        %v486 = vrot.slane %v485, 1
        %v487 = vmax.f32 %v485, %v486
        %v488 = vmax.f32 %v446, %v449
        %v489 = vrot.slane %v488, 4
        %v490 = vmax.f32 %v488, %v489
        %v491 = vrot.slane %v490, 2
        %v492 = vmax.f32 %v490, %v491
        %v493 = vrot.slane %v492, 1
        %v494 = vmax.f32 %v492, %v493
        %v495 = vmin.f32 %v479, %v487
        %v496 = vmin.f32 %v480, %v494
        %v499 = vrot.slane %v496, 7
        %vm500 = vcmask 1040384
        %v501 = vsel %vm500, %v495, %v499
        %v503 = vlaneseq
        %vm504 = vcmp.ge.s32.totalorder %v503, 0
        %vm505 = vcmp.lt.s32.totalorder %v503, 256
        %vm506 = vmand %vm504, %vm505
        %507 = vst.msk [vmem:[%s176] sm:$0x3] %vm506, %v501
        %s508 = sand.u32 %s93, 1
        %s509 = scalar_lea.sflag [#allocation3], %s508
        %s510 = sand.u32 %s93, 1
        %s511 = smul.addr %s510, 2
        %s512 = scalar_lea.vmem [#allocation2], %s511
        // Predicated region
        $region33: #{monotonic_nn_multiv.1} parent=31 // pred_check
          %p513 = pneg %p103
        $region34: #{monotonic_nn_multiv.1} parent=31 // pred_check_branch
          %515 = sbr.rel (%p513) target = $region36
        $region35: #{monotonic_nn_multiv.1} parent=31 // pred_region
          %s516 = smul.u32 2, %s17
          %518 = vsyncadd %s509, 0
          %s519 = scalar_lea.hbm %s3, %s516
          %s521 = sshll.u32 %s512, 4
          %s522 = int_to_ptr.vmem [resolvable:$true] %s521
          %s523 = sshll.u32 %s519, 4
          %s524 = int_to_ptr.hbm [resolvable:$true] %s523
          %526 = dma.vmem_to_hbm [thread:$0]  %s522, 32, %s524, %s509
        $region36: #{monotonic_nn_multiv.1} parent=31 // pred_fallthru
          _
      $region32: #{monotonic_nn_multiv.1} parent=5 // pred_fallthru
        _
      %p527 = scmp.le.s32.totalorder 2, %s12
      // Predicated region
      $region37: #{monotonic_nn_multiv.1} parent=5 // pred_check
        %p528 = pneg %p527
      $region38: #{monotonic_nn_multiv.1} parent=5 // pred_check_branch
        %530 = sbr.rel (%p528) target = $region40
      $region39: #{monotonic_nn_multiv.1} parent=5 // pred_region
        %s531 = ssub.s32 %s12, 2
        // Predicated region
        $region41: #{monotonic_nn_multiv.1} parent=39 // pred_check
          %p532 = pneg %p109
        $region42: #{monotonic_nn_multiv.1} parent=39 // pred_check_branch
          %534 = sbr.rel (%p532) target = $region44
        $region43: #{monotonic_nn_multiv.1} parent=39 // pred_region
          %s535 = sand.u32 %s94, 1
          %s536 = scalar_lea.sflag [#allocation3], %s535
          %s537 = sand.u32 %s94, 1
          %s538 = smul.addr %s537, 2
          %s539 = scalar_lea.vmem [#allocation2], %s538
          %541 = dma.done %s536, 32
        $region44: #{monotonic_nn_multiv.1} parent=39 // pred_fallthru
          _
      $region40: #{monotonic_nn_multiv.1} parent=5 // pred_fallthru
        _
    $region6: #{monotonic_nn_multiv.1} parent=1 // loop_footer
      %s16 = sadd.s32 1, %s12
    $region7: #{monotonic_nn_multiv.1} parent=1 // loop_footer_branch
      %11 = sbr.rel target = $region3
    $region8: #{monotonic_nn_multiv.1} parent=1 // loop_exit
      _
    %542 = vsyncpa [#allocation3], 1
    %s543 = scalar_lea.sflag [#allocation3], 1
    %544 = vsyncpa %s543, 1

</llo_original>
